<compile_context>
chip_gen: v5e
topology: v5e:2x2
jax: 0.10.0
libtpu: 0.0.40
codegen_flags: <defaults>
</compile_context>

<pallas_src>
import functools

import jax
import jax.numpy as jnp
from jax import lax
from jax.experimental import pallas as pl
from jax.experimental.pallas import tpu as pltpu

_LANES = 128
_SUBLANES = 8


def _round_up(x, m):
    return ((x + m - 1) // m) * m


def _pad_axis(a, axis, multiple):
    size = a.shape[axis]
    pad = (-size) % multiple
    if pad == 0:
        return a
    widths = [(0, 0)] * a.ndim
    widths[axis] = (0, pad)
    return jnp.pad(a, widths)


# ---------------------------------------------------------------------------
# Kernel
# ---------------------------------------------------------------------------
def _mlp_head_kernel(x_ref, w1_ref, b1_ref, w2_ref, b2_ref, w3_ref, b3_ref,
                     w4t_ref, b4_ref, o_ref):
    """Fused MLP head on one (TILE_N, F) row tile, emitting a (1, TILE_N) row.

    Matmul operands bf16 (MXU), accumulation + elementwise math f32.
    """
    # In-kernel f32 -> bf16 cast (one VPU pass in VMEM, hidden under DMA/MXU).
    x = x_ref[...].astype(w1_ref.dtype)                       # (TILE_N, F) bf16

    # Layer 1: Linear(input_dim, hidden) + ReLU   (Dropout == identity in eval)
    h = jnp.dot(x, w1_ref[...], preferred_element_type=jnp.float32)
    h = jnp.maximum(h + b1_ref[...], 0.0)

    # Layer 2: Linear(hidden, hidden) + ReLU
    h = jnp.dot(h.astype(w2_ref.dtype), w2_ref[...],
                preferred_element_type=jnp.float32)
    h = jnp.maximum(h + b2_ref[...], 0.0)

    # Layer 3: Linear(hidden, hidden) + ReLU
    h = jnp.dot(h.astype(w3_ref.dtype), w3_ref[...],
                preferred_element_type=jnp.float32)
    h = jnp.maximum(h + b3_ref[...], 0.0)

    # Output layer, computed transposed so the node axis lands on output LANES:
    #   (8, H) contracted with (TILE_N, H) on H  ->  (8, TILE_N); only row 0 of
    #   w4t is real (rows 1..7 are zero padding for sublane alignment).
    logits = lax.dot_general(
        w4t_ref[...], h.astype(w4t_ref.dtype),
        dimension_numbers=(((1,), (1,)), ((), ())),
        preferred_element_type=jnp.float32)                    # (8, TILE_N)
    row = logits[0:1, :] + b4_ref[0]                           # (1, TILE_N)
    # Numerically-stable sigmoid via tanh (EUP slot): sigma(x) = 0.5*(tanh(x/2)+1)
    o_ref[...] = (0.5 * (jnp.tanh(0.5 * row) + 1.0)).astype(o_ref.dtype)


# ---------------------------------------------------------------------------
# One-time parameter preparation (outside the per-step jit)
# ---------------------------------------------------------------------------
def prepare_params(params, compute_dtype=jnp.bfloat16):
    """Pad hidden dim to 128-lane multiples, cast weights to bf16 / biases to f32,
    and pre-transpose the output layer. Call once; reuse the result every step."""
    f, hidden = params["w1"].shape
    assert params["w2"].shape == (hidden, hidden)
    assert params["w3"].shape == (hidden, hidden)
    assert params["w4"].shape == (hidden, 1)

    w1 = _pad_axis(params["w1"], 1, _LANES).astype(compute_dtype)
    b1 = _pad_axis(params["b1"].reshape(1, -1), 1, _LANES).astype(jnp.float32)
    w2 = _pad_axis(_pad_axis(params["w2"], 0, _LANES), 1, _LANES).astype(compute_dtype)
    b2 = _pad_axis(params["b2"].reshape(1, -1), 1, _LANES).astype(jnp.float32)
    w3 = _pad_axis(_pad_axis(params["w3"], 0, _LANES), 1, _LANES).astype(compute_dtype)
    b3 = _pad_axis(params["b3"].reshape(1, -1), 1, _LANES).astype(jnp.float32)
    # (hidden, 1) -> (1, hidden) -> zero-pad to (8, hidden_padded) for the MXU.
    w4t = _pad_axis(_pad_axis(params["w4"].T, 0, _SUBLANES), 1, _LANES).astype(compute_dtype)
    b4 = params["b4"].reshape(-1).astype(jnp.float32)          # (1,) SMEM scalar
    return {"w1": w1, "b1": b1, "w2": w2, "b2": b2, "w3": w3, "b3": b3,
            "w4t": w4t, "b4": b4}


# ---------------------------------------------------------------------------
# Wrapper
# ---------------------------------------------------------------------------
@functools.partial(jax.jit, static_argnames=("tile_n",))
def finetuning_model_forward(node_feats, prepared, *, tile_n=2048):
    """Runs the fused MLP head with a row-tiled Pallas grid.

    node_feats: (N, input_dim) float32 (bf16 also accepted — preferred on v5e)
    prepared:   output of prepare_params()
    Returns:    (N, 1) float32 sigmoid probabilities.
    """
    n, f = node_feats.shape
    assert prepared["w1"].shape[0] == f, "w1 must be stored (in_features, out_features)"

    # Row tile: forced to a multiple of 128 (node axis is the OUTPUT lane axis
    # and the x block's sublane axis); >= 2K by default to amortize the
    # ~0.35us per-grid-step overhead; shrunk for small N.
    tile_n_eff = min(_round_up(tile_n, _LANES), _round_up(n, _LANES))
    tile_n_eff = max(tile_n_eff, _LANES)
    grid = (pl.cdiv(n, tile_n_eff),)   # ragged last block handled by Pallas

    resident = lambda a: pl.BlockSpec(a.shape, lambda i: (0, 0))
    in_specs = [
        pl.BlockSpec((tile_n_eff, f), lambda i: (i, 0)),         # node-feature rows
        resident(prepared["w1"]), resident(prepared["b1"]),
        resident(prepared["w2"]), resident(prepared["b2"]),
        resident(prepared["w3"]), resident(prepared["b3"]),
        resident(prepared["w4t"]),
        pl.BlockSpec(memory_space=pltpu.MemorySpace.SMEM),       # b4 scalar
    ]
    out_specs = pl.BlockSpec((1, tile_n_eff), lambda i: (0, i))  # lane-dense row

    out = pl.pallas_call(
        _mlp_head_kernel,
        out_shape=jax.ShapeDtypeStruct((1, n), jnp.float32),
        grid=grid,
        in_specs=in_specs,
        out_specs=out_specs,
        compiler_params=pltpu.CompilerParams(
            dimension_semantics=("parallel",),      # shard rows across TCs (v7x)
            vmem_limit_bytes=32 * 1024 * 1024,      # ample; safe on v5e/v6e/v7x
        ),
    )(node_feats, prepared["w1"], prepared["b1"], prepared["w2"], prepared["b2"],
      prepared["w3"], prepared["b3"], prepared["w4t"], prepared["b4"])

    return out.reshape(n, 1)


# ---------------------------------------------------------------------------
# Parameters + references
# ---------------------------------------------------------------------------
def init_params(key, input_dim, hidden_dim):
    """Deterministic synthetic parameters (same shapes as the nn.Linear layers,
    stored as (in, out) weights / (1, out) biases)."""
    ks = jax.random.split(key, 8)
    scale = 0.1

    def lin(kw, kb, fan_in, fan_out):
        w = scale * jax.random.normal(kw, (fan_in, fan_out), dtype=jnp.float32)
        b = scale * jax.random.normal(kb, (1, fan_out), dtype=jnp.float32)
        return w, b

    w1, b1 = lin(ks[0], ks[1], input_dim, hidden_dim)
    w2, b2 = lin(ks[2], ks[3], hidden_dim, hidden_dim)
    w3, b3 = lin(ks[4], ks[5], hidden_dim, hidden_dim)
    w4, b4 = lin(ks[6], ks[7], hidden_dim, 1)
    return {"w1": w1, "b1": b1, "w2": w2, "b2": b2,
            "w3": w3, "b3": b3, "w4": w4, "b4": b4}


def reference_forward(node_feats, p, compute_dtype=jnp.bfloat16):
    """Pure-JAX reference with the same bf16-operand / f32-accumulate scheme."""
    def lin(x, w, b):
        return jnp.dot(x.astype(compute_dtype), w.astype(compute_dtype),
                       preferred_element_type=jnp.float32) + b.astype(jnp.float32)
    h = jnp.maximum(lin(node_feats, p["w1"], p["b1"]), 0.0)
    h = jnp.maximum(lin(h, p["w2"], p["b2"]), 0.0)
    h = jnp.maximum(lin(h, p["w3"], p["b3"]), 0.0)
    return jax.nn.sigmoid(lin(h, p["w4"], p["b4"]))


def reference_forward_f32(node_feats, p):
    """Full-f32 reference (module semantics) for a looser sanity check."""
    h = jnp.maximum(node_feats @ p["w1"] + p["b1"], 0.0)
    h = jnp.maximum(h @ p["w2"] + p["b2"], 0.0)
    h = jnp.maximum(h @ p["w3"] + p["b3"], 0.0)
    return jax.nn.sigmoid(h @ p["w4"] + p["b4"])


# ---------------------------------------------------------------------------
# Demo / correctness check
# ---------------------------------------------------------------------------
if __name__ == "__main__":
    key = jax.random.PRNGKey(0)
    k_in, k_params = jax.random.split(key)

    N = 203          # number of nodes (deliberately not a tile multiple)
    INPUT_DIM = 300  # gin_supervised_contextpred node-embedding dim
    HIDDEN = 128     # module default hidden_dim

    node_feats = jax.random.normal(k_in, (N, INPUT_DIM), dtype=jnp.float32)
    params = init_params(k_params, INPUT_DIM, HIDDEN)

    prepared = prepare_params(params)            # one-time prep, outside the jit

    out = finetuning_model_forward(node_feats, prepared)
    out = jax.block_until_ready(out)
    assert out.shape == (N, 1), out.shape

    # Tight check against a bf16-operand reference (same numerics scheme).
    ref_bf16 = reference_forward(node_feats, params)
    assert jnp.allclose(out, ref_bf16, atol=2e-3, rtol=2e-3), (
        "mismatch vs bf16 reference: max abs err "
        f"{jnp.max(jnp.abs(out - ref_bf16))}")

    # Loose check against the full-f32 module semantics.
    ref_f32 = reference_forward_f32(node_feats, params)
    assert jnp.allclose(out, ref_f32, atol=3e-2, rtol=3e-2), (
        "mismatch vs f32 reference: max abs err "
        f"{jnp.max(jnp.abs(out - ref_f32))}")

    print("KERNEL_OK")
</pallas_src>

<mosaic_0001>
module attributes {stable_mosaic.version = 11 : i64} {
  func.func @_mlp_head_kernel(%arg0: i32, %arg1: memref<256x300xf32, #tpu.memory_space<vmem>>, %arg2: memref<300x128xbf16, #tpu.memory_space<vmem>>, %arg3: memref<1x128xf32, #tpu.memory_space<vmem>>, %arg4: memref<128x128xbf16, #tpu.memory_space<vmem>>, %arg5: memref<1x128xf32, #tpu.memory_space<vmem>>, %arg6: memref<128x128xbf16, #tpu.memory_space<vmem>>, %arg7: memref<1x128xf32, #tpu.memory_space<vmem>>, %arg8: memref<8x128xbf16, #tpu.memory_space<vmem>>, %arg9: memref<1xf32, #tpu.memory_space<smem>>, %arg10: memref<1x256xf32, #tpu.memory_space<vmem>>) attributes {dimension_semantics = [#tpu.dimension_semantics<parallel>], iteration_bounds = array<i64: 1>, scalar_prefetch = 0 : i64, scratch_operands = 0 : i64, tpu.core_type = #tpu.core_type<tc>, window_params = [{transform_indices = @transform_0, window_bounds = array<i64: 256, 300>}, {pipeline_mode = #tpu.pipeline_mode<synchronous>, transform_indices = @transform_1, window_bounds = array<i64: 300, 128>}, {pipeline_mode = #tpu.pipeline_mode<synchronous>, transform_indices = @transform_2, window_bounds = array<i64: 1, 128>}, {pipeline_mode = #tpu.pipeline_mode<synchronous>, transform_indices = @transform_3, window_bounds = array<i64: 128, 128>}, {pipeline_mode = #tpu.pipeline_mode<synchronous>, transform_indices = @transform_4, window_bounds = array<i64: 1, 128>}, {pipeline_mode = #tpu.pipeline_mode<synchronous>, transform_indices = @transform_5, window_bounds = array<i64: 128, 128>}, {pipeline_mode = #tpu.pipeline_mode<synchronous>, transform_indices = @transform_6, window_bounds = array<i64: 1, 128>}, {pipeline_mode = #tpu.pipeline_mode<synchronous>, transform_indices = @transform_7, window_bounds = array<i64: 8, 128>}, {transform_indices = @transform_8, window_bounds = array<i64: 1>}, {transform_indices = @transform_9, window_bounds = array<i64: 1, 256>}]} {
    %c0 = arith.constant 0 : index
    %c0_0 = arith.constant 0 : index
    %0 = vector.load %arg1[%c0, %c0_0] : memref<256x300xf32, #tpu.memory_space<vmem>>, vector<256x300xf32>
    %1 = arith.truncf %0 : vector<256x300xf32> to vector<256x300xbf16>
    %c0_1 = arith.constant 0 : index
    %c0_2 = arith.constant 0 : index
    %2 = vector.load %arg2[%c0_1, %c0_2] : memref<300x128xbf16, #tpu.memory_space<vmem>>, vector<300x128xbf16>
    %cst = arith.constant dense<0.000000e+00> : vector<256x128xf32>
    %3 = tpu.matmul %1, %2, %cst {dimension_numbers = #tpu.dot_dimension_numbers<[1], [0], [0], [1], [0, 0, 1, 1], [], []>} : vector<256x300xbf16>, vector<300x128xbf16>, vector<256x128xf32> -> vector<256x128xf32>
    %c0_3 = arith.constant 0 : index
    %c0_4 = arith.constant 0 : index
    %4 = vector.load %arg3[%c0_3, %c0_4] : memref<1x128xf32, #tpu.memory_space<vmem>>, vector<1x128xf32>
    %5 = vector.broadcast %4 : vector<1x128xf32> to vector<256x128xf32>
    %6 = arith.addf %3, %5 : vector<256x128xf32>
    %cst_5 = arith.constant 0.000000e+00 : f32
    %7 = vector.broadcast %cst_5 : f32 to vector<256x128xf32>
    %8 = arith.maximumf %6, %7 : vector<256x128xf32>
    %9 = arith.truncf %8 : vector<256x128xf32> to vector<256x128xbf16>
    %c0_6 = arith.constant 0 : index
    %c0_7 = arith.constant 0 : index
    %10 = vector.load %arg4[%c0_6, %c0_7] : memref<128x128xbf16, #tpu.memory_space<vmem>>, vector<128x128xbf16>
    %cst_8 = arith.constant dense<0.000000e+00> : vector<256x128xf32>
    %11 = tpu.matmul %9, %10, %cst_8 {dimension_numbers = #tpu.dot_dimension_numbers<[1], [0], [0], [1], [0, 0, 1, 1], [], []>} : vector<256x128xbf16>, vector<128x128xbf16>, vector<256x128xf32> -> vector<256x128xf32>
    %c0_9 = arith.constant 0 : index
    %c0_10 = arith.constant 0 : index
    %12 = vector.load %arg5[%c0_9, %c0_10] : memref<1x128xf32, #tpu.memory_space<vmem>>, vector<1x128xf32>
    %13 = vector.broadcast %12 : vector<1x128xf32> to vector<256x128xf32>
    %14 = arith.addf %11, %13 : vector<256x128xf32>
    %cst_11 = arith.constant 0.000000e+00 : f32
    %15 = vector.broadcast %cst_11 : f32 to vector<256x128xf32>
    %16 = arith.maximumf %14, %15 : vector<256x128xf32>
    %17 = arith.truncf %16 : vector<256x128xf32> to vector<256x128xbf16>
    %c0_12 = arith.constant 0 : index
    %c0_13 = arith.constant 0 : index
    %18 = vector.load %arg6[%c0_12, %c0_13] : memref<128x128xbf16, #tpu.memory_space<vmem>>, vector<128x128xbf16>
    %cst_14 = arith.constant dense<0.000000e+00> : vector<256x128xf32>
    %19 = tpu.matmul %17, %18, %cst_14 {dimension_numbers = #tpu.dot_dimension_numbers<[1], [0], [0], [1], [0, 0, 1, 1], [], []>} : vector<256x128xbf16>, vector<128x128xbf16>, vector<256x128xf32> -> vector<256x128xf32>
    %c0_15 = arith.constant 0 : index
    %c0_16 = arith.constant 0 : index
    %20 = vector.load %arg7[%c0_15, %c0_16] : memref<1x128xf32, #tpu.memory_space<vmem>>, vector<1x128xf32>
    %21 = vector.broadcast %20 : vector<1x128xf32> to vector<256x128xf32>
    %22 = arith.addf %19, %21 : vector<256x128xf32>
    %cst_17 = arith.constant 0.000000e+00 : f32
    %23 = vector.broadcast %cst_17 : f32 to vector<256x128xf32>
    %24 = arith.maximumf %22, %23 : vector<256x128xf32>
    %c0_18 = arith.constant 0 : index
    %c0_19 = arith.constant 0 : index
    %25 = vector.load %arg8[%c0_18, %c0_19] : memref<8x128xbf16, #tpu.memory_space<vmem>>, vector<8x128xbf16>
    %26 = arith.truncf %24 : vector<256x128xf32> to vector<256x128xbf16>
    %cst_20 = arith.constant dense<0.000000e+00> : vector<8x256xf32>
    %27 = tpu.matmul %25, %26, %cst_20 {dimension_numbers = #tpu.dot_dimension_numbers<[1], [1], [0], [0], [0, 0, 1, 0], [], []>} : vector<8x128xbf16>, vector<256x128xbf16>, vector<8x256xf32> -> vector<8x256xf32>
    %28 = vector.extract_strided_slice %27 {offsets = [0, 0], sizes = [1, 256], strides = [1, 1]} : vector<8x256xf32> to vector<1x256xf32>
    %c0_21 = arith.constant 0 : index
    %29 = memref.load %arg9[%c0_21] : memref<1xf32, #tpu.memory_space<smem>>
    %30 = vector.broadcast %29 : f32 to vector<1x256xf32>
    %31 = arith.addf %28, %30 : vector<1x256xf32>
    %cst_22 = arith.constant 5.000000e-01 : f32
    %32 = vector.broadcast %cst_22 : f32 to vector<1x256xf32>
    %33 = arith.mulf %32, %31 : vector<1x256xf32>
    %34 = math.tanh %33 : vector<1x256xf32>
    %cst_23 = arith.constant 1.000000e+00 : f32
    %35 = vector.broadcast %cst_23 : f32 to vector<1x256xf32>
    %36 = arith.addf %34, %35 : vector<1x256xf32>
    %cst_24 = arith.constant 5.000000e-01 : f32
    %37 = vector.broadcast %cst_24 : f32 to vector<1x256xf32>
    %38 = arith.mulf %37, %36 : vector<1x256xf32>
    %c0_25 = arith.constant 0 : index
    %c0_26 = arith.constant 0 : index
    %39 = vector.load %arg10[%c0_25, %c0_26] : memref<1x256xf32, #tpu.memory_space<vmem>>, vector<1x256xf32>
    tpu.vector_store %arg10[%c0_25, %c0_26], %38 {strides = array<i32>} : memref<1x256xf32, #tpu.memory_space<vmem>>, vector<1x256xf32>,
    return
  }
  func.func @transform_0(%arg0: i32) -> (i32, i32) {
    %c0_i32 = arith.constant 0 : i32
    %c0_i32_0 = arith.constant 0 : i32
    return %arg0, %c0_i32 : i32, i32
  }
  func.func @transform_1(%arg0: i32) -> (i32, i32) {
    %c0_i32 = arith.constant 0 : i32
    %c0_i32_0 = arith.constant 0 : i32
    %c0_i32_1 = arith.constant 0 : i32
    return %c0_i32, %c0_i32_0 : i32, i32
  }
  func.func @transform_2(%arg0: i32) -> (i32, i32) {
    %c0_i32 = arith.constant 0 : i32
    %c0_i32_0 = arith.constant 0 : i32
    %c0_i32_1 = arith.constant 0 : i32
    return %c0_i32, %c0_i32_0 : i32, i32
  }
  func.func @transform_3(%arg0: i32) -> (i32, i32) {
    %c0_i32 = arith.constant 0 : i32
    %c0_i32_0 = arith.constant 0 : i32
    %c0_i32_1 = arith.constant 0 : i32
    return %c0_i32, %c0_i32_0 : i32, i32
  }
  func.func @transform_4(%arg0: i32) -> (i32, i32) {
    %c0_i32 = arith.constant 0 : i32
    %c0_i32_0 = arith.constant 0 : i32
    %c0_i32_1 = arith.constant 0 : i32
    return %c0_i32, %c0_i32_0 : i32, i32
  }
  func.func @transform_5(%arg0: i32) -> (i32, i32) {
    %c0_i32 = arith.constant 0 : i32
    %c0_i32_0 = arith.constant 0 : i32
    %c0_i32_1 = arith.constant 0 : i32
    return %c0_i32, %c0_i32_0 : i32, i32
  }
  func.func @transform_6(%arg0: i32) -> (i32, i32) {
    %c0_i32 = arith.constant 0 : i32
    %c0_i32_0 = arith.constant 0 : i32
    %c0_i32_1 = arith.constant 0 : i32
    return %c0_i32, %c0_i32_0 : i32, i32
  }
  func.func @transform_7(%arg0: i32) -> (i32, i32) {
    %c0_i32 = arith.constant 0 : i32
    %c0_i32_0 = arith.constant 0 : i32
    %c0_i32_1 = arith.constant 0 : i32
    return %c0_i32, %c0_i32_0 : i32, i32
  }
  func.func @transform_8(%arg0: i32) -> i32 {
    %c0_i32 = arith.constant 0 : i32
    %c0_i32_0 = arith.constant 0 : i32
    return %c0_i32 : i32
  }
  func.func @transform_9(%arg0: i32) -> (i32, i32) {
    %c0_i32 = arith.constant 0 : i32
    %c0_i32_0 = arith.constant 0 : i32
    return %c0_i32, %arg0 : i32, i32
  }
}

</mosaic_0001>

<llo_original>
// kernel: finetuning_model_forward.1
$region0: #{finetuning_model_forward.1}
  #allocation0 [shape = 'u32[]', space=smem, size = 0x4, offset = 0x4, fixed_abs, tag = 'smem constant byte address 0x4 - core index']
  #allocation1 [shape = 'u32[72,128]{1,0:T(1,128)}', space=vmem, size = 0x9000, scoped, tag = 'internal scratch']
  #allocation2 [shape = 'f32[1]{0:T(128)S(6)}', space=smem, size = 0x200, scoped, tag = 'scoped memory for finetuning_model_forward.1']
  %s0 = inlined_call_operand.vmem [shape: f32[203,300], index: 0, kind: input, shape index: {}]
  %s1 = inlined_call_operand.vmem [shape: bf16[300,128], index: 1, kind: input, shape index: {}]
  %s2 = inlined_call_operand.vmem [shape: f32[1,128], index: 2, kind: input, shape index: {}]
  %s3 = inlined_call_operand.vmem [shape: bf16[128,128], index: 3, kind: input, shape index: {}]
  %s4 = inlined_call_operand.vmem [shape: f32[1,128], index: 4, kind: input, shape index: {}]
  %s5 = inlined_call_operand.vmem [shape: bf16[128,128], index: 5, kind: input, shape index: {}]
  %s6 = inlined_call_operand.vmem [shape: f32[1,128], index: 6, kind: input, shape index: {}]
  %s7 = inlined_call_operand.vmem [shape: bf16[8,128], index: 7, kind: input, shape index: {}]
  %s8 = inlined_call_operand.<no memory space> [shape: f32[1], index: 8, kind: input, shape index: {}]
  %s9 = inlined_call_operand.hbm [shape: f32[1,203], index: 9, kind: output, shape index: {}]
  %s10 = sld [smem:[#allocation0]]
  $region46: #{finetuning_model_forward.1} parent=0
    _
  %s12 = ssub.s32 1, %s10
  %s13 = scalar_select 0, %s12, %s10
  %14 = sst [smem:[#allocation2]] %s8
  $region1: #{finetuning_model_forward.1} parent=0
    #allocation3 [shape = 'u8[1024]{0}', space=vmem, size = 0x400, scoped, tag = 'output window, operand 0, single buffered']
    #allocation4 [shape = 's32[1]{0}', space=sflag, size = 0x4, scoped, tag = 'scoped memory for finetuning_model_forward.1']
    %15 = vsyncpa [#allocation4], 0
    // Predicated region
    $region2: #{finetuning_model_forward.1} parent=1 // pred_check
      _
    $region3: #{finetuning_model_forward.1} parent=1 // pred_check_branch
      %17 = sbr.rel (0) target = $region5
    $region4: #{finetuning_model_forward.1} parent=1 // pred_region
      _
    $region5: #{finetuning_model_forward.1} parent=1 // pred_fallthru
      _
    // Predicated region
    $region6: #{finetuning_model_forward.1} parent=1 // pred_check
      _
    $region7: #{finetuning_model_forward.1} parent=1 // pred_check_branch
      %19 = sbr.rel (0) target = $region9
    $region8: #{finetuning_model_forward.1} parent=1 // pred_region
      _
    $region9: #{finetuning_model_forward.1} parent=1 // pred_fallthru
      _
    // Predicated region
    $region10: #{finetuning_model_forward.1} parent=1 // pred_check
      _
    $region11: #{finetuning_model_forward.1} parent=1 // pred_check_branch
      %21 = sbr.rel (0) target = $region13
    $region12: #{finetuning_model_forward.1} parent=1 // pred_region
      _
    $region13: #{finetuning_model_forward.1} parent=1 // pred_fallthru
      _
    // Predicated region
    $region14: #{finetuning_model_forward.1} parent=1 // pred_check
      _
    $region15: #{finetuning_model_forward.1} parent=1 // pred_check_branch
      %23 = sbr.rel (0) target = $region17
    $region16: #{finetuning_model_forward.1} parent=1 // pred_region
      _
    $region17: #{finetuning_model_forward.1} parent=1 // pred_fallthru
      _
    // Predicated region
    $region18: #{finetuning_model_forward.1} parent=1 // pred_check
      _
    $region19: #{finetuning_model_forward.1} parent=1 // pred_check_branch
      %25 = sbr.rel (0) target = $region21
    $region20: #{finetuning_model_forward.1} parent=1 // pred_region
      _
    $region21: #{finetuning_model_forward.1} parent=1 // pred_fallthru
      _
    // Predicated region
    $region22: #{finetuning_model_forward.1} parent=1 // pred_check
      _
    $region23: #{finetuning_model_forward.1} parent=1 // pred_check_branch
      %27 = sbr.rel (0) target = $region25
    $region24: #{finetuning_model_forward.1} parent=1 // pred_region
      _
    $region25: #{finetuning_model_forward.1} parent=1 // pred_fallthru
      _
    // Predicated region
    $region26: #{finetuning_model_forward.1} parent=1 // pred_check
      _
    $region27: #{finetuning_model_forward.1} parent=1 // pred_check_branch
      %29 = sbr.rel (0) target = $region29
    $region28: #{finetuning_model_forward.1} parent=1 // pred_region
      _
    $region29: #{finetuning_model_forward.1} parent=1 // pred_fallthru
      _
    // Predicated region
    $region30: #{finetuning_model_forward.1} parent=1 // pred_check
      _
    $region31: #{finetuning_model_forward.1} parent=1 // pred_check_branch
      %31 = sbr.rel (0) target = $region33
    $region32: #{finetuning_model_forward.1} parent=1 // pred_region
      _
    $region33: #{finetuning_model_forward.1} parent=1 // pred_fallthru
      _
    // Predicated region
    $region34: #{finetuning_model_forward.1} parent=1 // pred_check
      _
    $region35: #{finetuning_model_forward.1} parent=1 // pred_check_branch
      %33 = sbr.rel (0) target = $region37
    $region36: #{finetuning_model_forward.1} parent=1 // pred_region
      _
    $region37: #{finetuning_model_forward.1} parent=1 // pred_fallthru
      _
    %v35 = vld [vmem:[%s0] sm:$0xff]
    %v36 = vld [vmem:[%s0 + $0x8] sm:$0xff]
    %v37 = vld [vmem:[%s0 + $0x10] sm:$0xff]
    %v38 = vld [vmem:[%s0 + $0x18] sm:$0xff]
    %v39 = vld [vmem:[%s0 + $0x20] sm:$0xff]
    %v40 = vld [vmem:[%s0 + $0x28] sm:$0xff]
    %v41 = vld [vmem:[%s0 + $0x30] sm:$0xff]
    %v42 = vld [vmem:[%s0 + $0x38] sm:$0xff]
    %v43 = vld [vmem:[%s0 + $0x40] sm:$0xff]
    %v44 = vld [vmem:[%s0 + $0x48] sm:$0xff]
    %v45 = vld [vmem:[%s0 + $0x50] sm:$0xff]
    %v46 = vld [vmem:[%s0 + $0x58] sm:$0xff]
    %v47 = vld [vmem:[%s0 + $0x60] sm:$0xff]
    %v48 = vld [vmem:[%s0 + $0x68] sm:$0xff]
    %v49 = vld [vmem:[%s0 + $0x70] sm:$0xff]
    %v50 = vld [vmem:[%s0 + $0x78] sm:$0xff]
    %v51 = vld [vmem:[%s0 + $0x80] sm:$0xff]
    %v52 = vld [vmem:[%s0 + $0x88] sm:$0xff]
    %v53 = vld [vmem:[%s0 + $0x90] sm:$0xff]
    %v54 = vld [vmem:[%s0 + $0x98] sm:$0xff]
    %v55 = vld [vmem:[%s0 + $0xa0] sm:$0xff]
    %v56 = vld [vmem:[%s0 + $0xa8] sm:$0xff]
    %v57 = vld [vmem:[%s0 + $0xb0] sm:$0xff]
    %v58 = vld [vmem:[%s0 + $0xb8] sm:$0xff]
    %v59 = vld [vmem:[%s0 + $0xc0] sm:$0xff]
    %v60 = vld [vmem:[%s0 + $0xc8] sm:$0xff]
    %v61 = vld [vmem:[%s0 + $0xd0] sm:$0xff]
    %v62 = vld [vmem:[%s0 + $0xd8] sm:$0xff]
    %v63 = vld [vmem:[%s0 + $0xe0] sm:$0xff]
    %v64 = vld [vmem:[%s0 + $0xe8] sm:$0xff]
    %v65 = vld [vmem:[%s0 + $0xf0] sm:$0xff]
    %v66 = vld [vmem:[%s0 + $0xf8] sm:$0xff]
    %v67 = vld [vmem:[%s0 + $0x100] sm:$0xff]
    %v68 = vld [vmem:[%s0 + $0x108] sm:$0xff]
    %v69 = vld [vmem:[%s0 + $0x110] sm:$0xff]
    %v70 = vld [vmem:[%s0 + $0x118] sm:$0xff]
    %v71 = vld [vmem:[%s0 + $0x120] sm:$0xff]
    %v72 = vld [vmem:[%s0 + $0x128] sm:$0xff]
    %v73 = vld [vmem:[%s0 + $0x130] sm:$0xff]
    %v74 = vld [vmem:[%s0 + $0x138] sm:$0xff]
    %v75 = vld [vmem:[%s0 + $0x140] sm:$0xff]
    %v76 = vld [vmem:[%s0 + $0x148] sm:$0xff]
    %v77 = vld [vmem:[%s0 + $0x150] sm:$0xff]
    %v78 = vld [vmem:[%s0 + $0x158] sm:$0xff]
    %v79 = vld [vmem:[%s0 + $0x160] sm:$0xff]
    %v80 = vld [vmem:[%s0 + $0x168] sm:$0xff]
    %v81 = vld [vmem:[%s0 + $0x170] sm:$0xff]
    %v82 = vld [vmem:[%s0 + $0x178] sm:$0xff]
    %v83 = vld [vmem:[%s0 + $0x180] sm:$0xff]
    %v84 = vld [vmem:[%s0 + $0x188] sm:$0xff]
    %v85 = vld [vmem:[%s0 + $0x190] sm:$0xff]
    %v86 = vld [vmem:[%s0 + $0x198] sm:$0xff]
    %v87 = vld [vmem:[%s0 + $0x1a0] sm:$0xff]
    %v88 = vld [vmem:[%s0 + $0x1a8] sm:$0xff]
    %v89 = vld [vmem:[%s0 + $0x1b0] sm:$0xff]
    %v90 = vld [vmem:[%s0 + $0x1b8] sm:$0xff]
    %v91 = vld [vmem:[%s0 + $0x1c0] sm:$0xff]
    %v92 = vld [vmem:[%s0 + $0x1c8] sm:$0xff]
    %v93 = vld [vmem:[%s0 + $0x1d0] sm:$0xff]
    %v94 = vld [vmem:[%s0 + $0x1d8] sm:$0xff]
    %v95 = vld [vmem:[%s0 + $0x1e0] sm:$0xff]
    %v96 = vld [vmem:[%s0 + $0x1e8] sm:$0xff]
    %v97 = vld [vmem:[%s0 + $0x1f0] sm:$0xff]
    %v98 = vld [vmem:[%s0 + $0x1f8] sm:$0xff]
    %v99 = vld [vmem:[%s0 + $0x200] sm:$0xff]
    %v100 = vld [vmem:[%s0 + $0x208] sm:$0xff]
    %v101 = vld [vmem:[%s0 + $0x210] sm:$0xff]
    %v102 = vld [vmem:[%s0 + $0x218] sm:$0xff]
    %v103 = vld [vmem:[%s0 + $0x220] sm:$0xff]
    %v104 = vld [vmem:[%s0 + $0x228] sm:$0xff]
    %v105 = vld [vmem:[%s0 + $0x230] sm:$0xff]
    %v106 = vld [vmem:[%s0 + $0x238] sm:$0xff]
    %v107 = vld [vmem:[%s0 + $0x240] sm:$0xff]
    %v108 = vld [vmem:[%s0 + $0x248] sm:$0xff]
    %v109 = vld [vmem:[%s0 + $0x250] sm:$0xff]
    %v110 = vld [vmem:[%s0 + $0x258] sm:$0xff]
    %v111 = vld [vmem:[%s0 + $0x260] sm:$0xff]
    %v112 = vld [vmem:[%s0 + $0x268] sm:$0xff]
    %v113 = vld [vmem:[%s0 + $0x270] sm:$0xff]
    %v114 = vld [vmem:[%s0 + $0x278] sm:$0xff]
    %v115 = vld [vmem:[%s0 + $0x280] sm:$0xff]
    %v116 = vld [vmem:[%s0 + $0x288] sm:$0xff]
    %v117 = vld [vmem:[%s0 + $0x290] sm:$0xff]
    %v118 = vld [vmem:[%s0 + $0x298] sm:$0xff]
    %v119 = vld [vmem:[%s0 + $0x2a0] sm:$0xff]
    %v120 = vld [vmem:[%s0 + $0x2a8] sm:$0xff]
    %v121 = vld [vmem:[%s0 + $0x2b0] sm:$0xff]
    %v122 = vld [vmem:[%s0 + $0x2b8] sm:$0xff]
    %v123 = vld [vmem:[%s0 + $0x2c0] sm:$0xff]
    %v124 = vld [vmem:[%s0 + $0x2c8] sm:$0xff]
    %v125 = vld [vmem:[%s0 + $0x2d0] sm:$0xff]
    %v126 = vld [vmem:[%s0 + $0x2d8] sm:$0xff]
    %v127 = vld [vmem:[%s0 + $0x2e0] sm:$0xff]
    %v128 = vld [vmem:[%s0 + $0x2e8] sm:$0xff]
    %v129 = vld [vmem:[%s0 + $0x2f0] sm:$0xff]
    %v130 = vld [vmem:[%s0 + $0x2f8] sm:$0xff]
    %v131 = vpack.c.bf16 %v38, %v35
    %v132 = vpack.c.bf16 %v39, %v36
    %v133 = vpack.c.bf16 %v40, %v37
    %v134 = vpack.c.bf16 %v44, %v41
    %v135 = vpack.c.bf16 %v45, %v42
    %v136 = vpack.c.bf16 %v46, %v43
    %v137 = vpack.c.bf16 %v50, %v47
    %v138 = vpack.c.bf16 %v51, %v48
    %v139 = vpack.c.bf16 %v52, %v49
    %v140 = vpack.c.bf16 %v56, %v53
    %v141 = vpack.c.bf16 %v57, %v54
    %v142 = vpack.c.bf16 %v58, %v55
    %v143 = vpack.c.bf16 %v62, %v59
    %v144 = vpack.c.bf16 %v63, %v60
    %v145 = vpack.c.bf16 %v64, %v61
    %v146 = vpack.c.bf16 %v68, %v65
    %v147 = vpack.c.bf16 %v69, %v66
    %v148 = vpack.c.bf16 %v70, %v67
    %v149 = vpack.c.bf16 %v74, %v71
    %v150 = vpack.c.bf16 %v75, %v72
    %v151 = vpack.c.bf16 %v76, %v73
    %v152 = vpack.c.bf16 %v80, %v77
    %v153 = vpack.c.bf16 %v81, %v78
    %v154 = vpack.c.bf16 %v82, %v79
    %v155 = vpack.c.bf16 %v86, %v83
    %v156 = vpack.c.bf16 %v87, %v84
    %v157 = vpack.c.bf16 %v88, %v85
    %v158 = vpack.c.bf16 %v92, %v89
    %v159 = vpack.c.bf16 %v93, %v90
    %v160 = vpack.c.bf16 %v94, %v91
    %v161 = vpack.c.bf16 %v98, %v95
    %v162 = vpack.c.bf16 %v99, %v96
    %v163 = vpack.c.bf16 %v100, %v97
    %v164 = vpack.c.bf16 %v104, %v101
    %v165 = vpack.c.bf16 %v105, %v102
    %v166 = vpack.c.bf16 %v106, %v103
    %v167 = vpack.c.bf16 %v110, %v107
    %v168 = vpack.c.bf16 %v111, %v108
    %v169 = vpack.c.bf16 %v112, %v109
    %v170 = vpack.c.bf16 %v116, %v113
    %v171 = vpack.c.bf16 %v117, %v114
    %v172 = vpack.c.bf16 %v118, %v115
    %v173 = vpack.c.bf16 %v122, %v119
    %v174 = vpack.c.bf16 %v123, %v120
    %v175 = vpack.c.bf16 %v124, %v121
    %v176 = vpack.c.bf16 %v128, %v125
    %v177 = vpack.c.bf16 %v129, %v126
    %v178 = vpack.c.bf16 %v130, %v127
    %v179 = vld [vmem:[%s1] sm:$0xf]
    %v180 = vld [vmem:[%s1 + $0x4] sm:$0xf]
    %v181 = vld [vmem:[%s1 + $0x8] sm:$0xf]
    %v182 = vld [vmem:[%s1 + $0xc] sm:$0xf]
    %v183 = vld [vmem:[%s1 + $0x10] sm:$0xf]
    %v184 = vld [vmem:[%s1 + $0x14] sm:$0xf]
    %v185 = vld [vmem:[%s1 + $0x18] sm:$0xf]
    %v186 = vld [vmem:[%s1 + $0x1c] sm:$0xf]
    %v187 = vld [vmem:[%s1 + $0x20] sm:$0xf]
    %v188 = vld [vmem:[%s1 + $0x24] sm:$0xf]
    %v189 = vld [vmem:[%s1 + $0x28] sm:$0xf]
    %v190 = vld [vmem:[%s1 + $0x2c] sm:$0xf]
    %v191 = vld [vmem:[%s1 + $0x30] sm:$0xf]
    %v192 = vld [vmem:[%s1 + $0x34] sm:$0xf]
    %v193 = vld [vmem:[%s1 + $0x38] sm:$0xf]
    %v194 = vld [vmem:[%s1 + $0x3c] sm:$0xf]
    %v195 = vld [vmem:[%s1 + $0x40] sm:$0xf]
    %v196 = vld [vmem:[%s1 + $0x44] sm:$0xf]
    %v197 = vld [vmem:[%s1 + $0x48] sm:$0xf]
    %v198 = vld [vmem:[%s1 + $0x4c] sm:$0xf]
    %v199 = vld [vmem:[%s1 + $0x50] sm:$0xf]
    %v200 = vld [vmem:[%s1 + $0x54] sm:$0xf]
    %v201 = vld [vmem:[%s1 + $0x58] sm:$0xf]
    %v202 = vld [vmem:[%s1 + $0x5c] sm:$0xf]
    %v203 = vld [vmem:[%s1 + $0x60] sm:$0xf]
    %v204 = vld [vmem:[%s1 + $0x64] sm:$0xf]
    %v205 = vld [vmem:[%s1 + $0x68] sm:$0xf]
    %v206 = vld [vmem:[%s1 + $0x6c] sm:$0xf]
    %v207 = vld [vmem:[%s1 + $0x70] sm:$0xf]
    %v208 = vld [vmem:[%s1 + $0x74] sm:$0xf]
    %v209 = vld [vmem:[%s1 + $0x78] sm:$0xf]
    %v210 = vld [vmem:[%s1 + $0x7c] sm:$0xf]
    %v211 = vld [vmem:[%s1 + $0x80] sm:$0xf]
    %v212 = vld [vmem:[%s1 + $0x84] sm:$0xf]
    %v213 = vld [vmem:[%s1 + $0x88] sm:$0xf]
    %v214 = vld [vmem:[%s1 + $0x8c] sm:$0xf]
    %v215 = vld [vmem:[%s1 + $0x90] sm:$0xf]
    %v216 = vld [vmem:[%s1 + $0x94] sm:$0x3]
    %v217 = vld [vmem:[%s2] sm:$0x1]
    %v219 = vperm.slane %v217, 0
    %v259 = vunpack.c.l.b16 %v179
    %v260 = vunpack.c.l.b16 %v180
    %v261 = vunpack.c.l.b16 %v181
    %v262 = vunpack.c.l.b16 %v182
    %v263 = vunpack.c.l.b16 %v183
    %v264 = vunpack.c.l.b16 %v184
    %v265 = vunpack.c.l.b16 %v185
    %v266 = vunpack.c.l.b16 %v186
    %v267 = vunpack.c.l.b16 %v187
    %v268 = vunpack.c.l.b16 %v188
    %v269 = vunpack.c.l.b16 %v189
    %v270 = vunpack.c.l.b16 %v190
    %v271 = vunpack.c.l.b16 %v191
    %v272 = vunpack.c.l.b16 %v192
    %v273 = vunpack.c.l.b16 %v193
    %v274 = vunpack.c.l.b16 %v194
    %v275 = vunpack.c.l.b16 %v195
    %v276 = vunpack.c.l.b16 %v196
    %v277 = vunpack.c.l.b16 %v197
    %v278 = vunpack.c.l.b16 %v198
    %v279 = vunpack.c.l.b16 %v199
    %v280 = vunpack.c.l.b16 %v200
    %v281 = vunpack.c.l.b16 %v201
    %v282 = vunpack.c.l.b16 %v202
    %v283 = vunpack.c.l.b16 %v203
    %v284 = vunpack.c.l.b16 %v204
    %v285 = vunpack.c.l.b16 %v205
    %v286 = vunpack.c.l.b16 %v206
    %v287 = vunpack.c.l.b16 %v207
    %v288 = vunpack.c.l.b16 %v208
    %v289 = vunpack.c.l.b16 %v209
    %v290 = vunpack.c.l.b16 %v210
    %v291 = vunpack.c.l.b16 %v211
    %v292 = vunpack.c.l.b16 %v212
    %v293 = vunpack.c.l.b16 %v213
    %v294 = vunpack.c.l.b16 %v214
    %v295 = vunpack.c.l.b16 %v215
    %v296 = vunpack.c.l.b16 %v216
    %v297 = vpack.c.b16 %v260, %v259
    %v298 = vpack.c.b16 %v262, %v261
    %v299 = vpack.c.b16 %v264, %v263
    %v300 = vpack.c.b16 %v266, %v265
    %v301 = vpack.c.b16 %v268, %v267
    %v302 = vpack.c.b16 %v270, %v269
    %v303 = vpack.c.b16 %v272, %v271
    %v304 = vpack.c.b16 %v274, %v273
    %v305 = vpack.c.b16 %v276, %v275
    %v306 = vpack.c.b16 %v278, %v277
    %v307 = vpack.c.b16 %v280, %v279
    %v308 = vpack.c.b16 %v282, %v281
    %v309 = vpack.c.b16 %v284, %v283
    %v310 = vpack.c.b16 %v286, %v285
    %v311 = vpack.c.b16 %v288, %v287
    %v312 = vpack.c.b16 %v290, %v289
    %v313 = vpack.c.b16 %v292, %v291
    %v314 = vpack.c.b16 %v294, %v293
    %v315 = vpack.c.b16 %v296, %v295
    %vm334 = vcmask 359424
    %v336 = vsel %vm334, %v133, 0
    %v339 = vsel %vm334, %v136, 0
    %v342 = vsel %vm334, %v139, 0
    %v345 = vsel %vm334, %v142, 0
    %v348 = vsel %vm334, %v145, 0
    %v351 = vsel %vm334, %v148, 0
    %v354 = vsel %vm334, %v151, 0
    %v357 = vsel %vm334, %v154, 0
    %v360 = vsel %vm334, %v157, 0
    %v363 = vsel %vm334, %v160, 0
    %v366 = vsel %vm334, %v163, 0
    %v369 = vsel %vm334, %v166, 0
    %v372 = vsel %vm334, %v169, 0
    %v375 = vsel %vm334, %v172, 0
    %v378 = vsel %vm334, %v175, 0
    %v381 = vsel %vm334, %v178, 0
    %vm383 = vcmask 1045504
    %v385 = vsel %vm383, %v315, 0
    %387 = vmatpush.bf16.msra.mxu0 %v304
    %388 = vmatpush.bf16.msra.mxu0 %v303
    %389 = vmatpush.bf16.msra.mxu0 %v302
    %390 = vmatpush.bf16.msra.mxu0 %v301
    %391 = vmatpush.bf16.msra.mxu0 %v300
    %392 = vmatpush.bf16.msra.mxu0 %v299
    %393 = vmatpush.bf16.msra.mxu0 %v298
    %394 = vmatpush.bf16.msra.mxu0 %v297
    %395 = vmatmul.bf16.gmra.mxu0 %v131
    %v396 = vpop.f32.mrf.mxu0
    %v397 = vadd.f32 %v219, %v396
    %v398 = vpop.f32.mrf.mxu0
    %v399 = vadd.f32 %v219, %v398
    %400 = vmatmul.bf16.gmra.mxu0 %v134
    %v401 = vpop.f32.mrf.mxu0
    %v402 = vadd.f32 %v219, %v401
    %v403 = vpop.f32.mrf.mxu0
    %v404 = vadd.f32 %v219, %v403
    %405 = vmatmul.bf16.gmra.mxu0 %v137
    %v406 = vpop.f32.mrf.mxu0
    %v407 = vadd.f32 %v219, %v406
    %v408 = vpop.f32.mrf.mxu0
    %v409 = vadd.f32 %v219, %v408
    %410 = vmatmul.bf16.gmra.mxu0 %v140
    %v411 = vpop.f32.mrf.mxu0
    %v412 = vadd.f32 %v219, %v411
    %v413 = vpop.f32.mrf.mxu0
    %v414 = vadd.f32 %v219, %v413
    %415 = vmatmul.bf16.gmra.mxu0 %v143
    %v416 = vpop.f32.mrf.mxu0
    %v417 = vadd.f32 %v219, %v416
    %v418 = vpop.f32.mrf.mxu0
    %v419 = vadd.f32 %v219, %v418
    %420 = vmatmul.bf16.gmra.mxu0 %v146
    %v421 = vpop.f32.mrf.mxu0
    %v422 = vadd.f32 %v219, %v421
    %v423 = vpop.f32.mrf.mxu0
    %v424 = vadd.f32 %v219, %v423
    %425 = vmatmul.bf16.gmra.mxu0 %v149
    %v426 = vpop.f32.mrf.mxu0
    %v427 = vadd.f32 %v219, %v426
    %v428 = vpop.f32.mrf.mxu0
    %v429 = vadd.f32 %v219, %v428
    %430 = vmatmul.bf16.gmra.mxu0 %v152
    %v431 = vpop.f32.mrf.mxu0
    %v432 = vadd.f32 %v219, %v431
    %v433 = vpop.f32.mrf.mxu0
    %v434 = vadd.f32 %v219, %v433
    %435 = vmatmul.bf16.gmra.mxu0 %v155
    %v436 = vpop.f32.mrf.mxu0
    %v437 = vadd.f32 %v219, %v436
    %v438 = vpop.f32.mrf.mxu0
    %v439 = vadd.f32 %v219, %v438
    %440 = vmatmul.bf16.gmra.mxu0 %v158
    %v441 = vpop.f32.mrf.mxu0
    %v442 = vadd.f32 %v219, %v441
    %v443 = vpop.f32.mrf.mxu0
    %v444 = vadd.f32 %v219, %v443
    %445 = vmatmul.bf16.gmra.mxu0 %v161
    %v446 = vpop.f32.mrf.mxu0
    %v447 = vadd.f32 %v219, %v446
    %v448 = vpop.f32.mrf.mxu0
    %v449 = vadd.f32 %v219, %v448
    %450 = vmatmul.bf16.gmra.mxu0 %v164
    %v451 = vpop.f32.mrf.mxu0
    %v452 = vadd.f32 %v219, %v451
    %v453 = vpop.f32.mrf.mxu0
    %v454 = vadd.f32 %v219, %v453
    %455 = vmatmul.bf16.gmra.mxu0 %v167
    %v456 = vpop.f32.mrf.mxu0
    %v457 = vadd.f32 %v219, %v456
    %v458 = vpop.f32.mrf.mxu0
    %v459 = vadd.f32 %v219, %v458
    %460 = vmatmul.bf16.gmra.mxu0 %v170
    %v461 = vpop.f32.mrf.mxu0
    %v462 = vadd.f32 %v219, %v461
    %v463 = vpop.f32.mrf.mxu0
    %v464 = vadd.f32 %v219, %v463
    %465 = vmatmul.bf16.gmra.mxu0 %v173
    %v466 = vpop.f32.mrf.mxu0
    %v467 = vadd.f32 %v219, %v466
    %v468 = vpop.f32.mrf.mxu0
    %v469 = vadd.f32 %v219, %v468
    %470 = vmatmul.bf16.gmra.mxu0 %v176
    %v471 = vpop.f32.mrf.mxu0
    %v472 = vadd.f32 %v219, %v471
    %v473 = vpop.f32.mrf.mxu0
    %v474 = vadd.f32 %v219, %v473
    %475 = vdwg.mxu0
    %476 = vmatpush.bf16.msra.mxu0 %v312
    %477 = vmatpush.bf16.msra.mxu0 %v311
    %478 = vmatpush.bf16.msra.mxu0 %v310
    %479 = vmatpush.bf16.msra.mxu0 %v309
    %480 = vmatpush.bf16.msra.mxu0 %v308
    %481 = vmatpush.bf16.msra.mxu0 %v307
    %482 = vmatpush.bf16.msra.mxu0 %v306
    %483 = vmatpush.bf16.msra.mxu0 %v305
    %484 = vmatmul.bf16.gmra.mxu0 %v132
    %v485 = vpop.f32.mrf.mxu0
    %v486 = vadd.f32 %v397, %v485
    %v487 = vpop.f32.mrf.mxu0
    %v488 = vadd.f32 %v399, %v487
    %489 = vmatmul.bf16.gmra.mxu0 %v135
    %v490 = vpop.f32.mrf.mxu0
    %v491 = vadd.f32 %v402, %v490
    %v492 = vpop.f32.mrf.mxu0
    %v493 = vadd.f32 %v404, %v492
    %494 = vmatmul.bf16.gmra.mxu0 %v138
    %v495 = vpop.f32.mrf.mxu0
    %v496 = vadd.f32 %v407, %v495
    %v497 = vpop.f32.mrf.mxu0
    %v498 = vadd.f32 %v409, %v497
    %499 = vmatmul.bf16.gmra.mxu0 %v141
    %v500 = vpop.f32.mrf.mxu0
    %v501 = vadd.f32 %v412, %v500
    %v502 = vpop.f32.mrf.mxu0
    %v503 = vadd.f32 %v414, %v502
    %504 = vmatmul.bf16.gmra.mxu0 %v144
    %v505 = vpop.f32.mrf.mxu0
    %v506 = vadd.f32 %v417, %v505
    %v507 = vpop.f32.mrf.mxu0
    %v508 = vadd.f32 %v419, %v507
    %509 = vmatmul.bf16.gmra.mxu0 %v147
    %v510 = vpop.f32.mrf.mxu0
    %v511 = vadd.f32 %v422, %v510
    %v512 = vpop.f32.mrf.mxu0
    %v513 = vadd.f32 %v424, %v512
    %514 = vmatmul.bf16.gmra.mxu0 %v150
    %v515 = vpop.f32.mrf.mxu0
    %v516 = vadd.f32 %v427, %v515
    %v517 = vpop.f32.mrf.mxu0
    %v518 = vadd.f32 %v429, %v517
    %519 = vmatmul.bf16.gmra.mxu0 %v153
    %v520 = vpop.f32.mrf.mxu0
    %v521 = vadd.f32 %v432, %v520
    %v522 = vpop.f32.mrf.mxu0
    %v523 = vadd.f32 %v434, %v522
    %524 = vmatmul.bf16.gmra.mxu0 %v156
    %v525 = vpop.f32.mrf.mxu0
    %v526 = vadd.f32 %v437, %v525
    %v527 = vpop.f32.mrf.mxu0
    %v528 = vadd.f32 %v439, %v527
    %529 = vmatmul.bf16.gmra.mxu0 %v159
    %v530 = vpop.f32.mrf.mxu0
    %v531 = vadd.f32 %v442, %v530
    %v532 = vpop.f32.mrf.mxu0
    %v533 = vadd.f32 %v444, %v532
    %534 = vmatmul.bf16.gmra.mxu0 %v162
    %v535 = vpop.f32.mrf.mxu0
    %v536 = vadd.f32 %v447, %v535
    %v537 = vpop.f32.mrf.mxu0
    %v538 = vadd.f32 %v449, %v537
    %539 = vmatmul.bf16.gmra.mxu0 %v165
    %v540 = vpop.f32.mrf.mxu0
    %v541 = vadd.f32 %v452, %v540
    %v542 = vpop.f32.mrf.mxu0
    %v543 = vadd.f32 %v454, %v542
    %544 = vmatmul.bf16.gmra.mxu0 %v168
    %v545 = vpop.f32.mrf.mxu0
    %v546 = vadd.f32 %v457, %v545
    %v547 = vpop.f32.mrf.mxu0
    %v548 = vadd.f32 %v459, %v547
    %549 = vmatmul.bf16.gmra.mxu0 %v171
    %v550 = vpop.f32.mrf.mxu0
    %v551 = vadd.f32 %v462, %v550
    %v552 = vpop.f32.mrf.mxu0
    %v553 = vadd.f32 %v464, %v552
    %554 = vmatmul.bf16.gmra.mxu0 %v174
    %v555 = vpop.f32.mrf.mxu0
    %v556 = vadd.f32 %v467, %v555
    %v557 = vpop.f32.mrf.mxu0
    %v558 = vadd.f32 %v469, %v557
    %559 = vmatmul.bf16.gmra.mxu0 %v177
    %v560 = vpop.f32.mrf.mxu0
    %v561 = vadd.f32 %v472, %v560
    %v562 = vpop.f32.mrf.mxu0
    %v563 = vadd.f32 %v474, %v562
    %564 = vdwg.mxu0
    %565 = vmatpush.bf16.msra.mxu0 0
    %566 = vmatpush.bf16.msra.mxu0 0
    %567 = vmatpush.bf16.msra.mxu0 0
    %568 = vmatpush.bf16.msra.mxu0 0
    %569 = vmatpush.bf16.msra.mxu0 0
    %570 = vmatpush.bf16.msra.mxu0 %v385
    %571 = vmatpush.bf16.msra.mxu0 %v314
    %572 = vmatpush.bf16.msra.mxu0 %v313
    %573 = vmatmul.bf16.gmra.mxu0 %v336
    %v574 = vpop.f32.mrf.mxu0
    %v575 = vadd.f32 %v486, %v574
    %v576 = vpop.f32.mrf.mxu0
    %v577 = vadd.f32 %v488, %v576
    %578 = vmatmul.bf16.gmra.mxu0 %v339
    %v579 = vpop.f32.mrf.mxu0
    %v580 = vadd.f32 %v491, %v579
    %v581 = vpop.f32.mrf.mxu0
    %v582 = vadd.f32 %v493, %v581
    %583 = vmatmul.bf16.gmra.mxu0 %v342
    %v584 = vpop.f32.mrf.mxu0
    %v585 = vadd.f32 %v496, %v584
    %v586 = vpop.f32.mrf.mxu0
    %v587 = vadd.f32 %v498, %v586
    %588 = vmatmul.bf16.gmra.mxu0 %v345
    %v589 = vpop.f32.mrf.mxu0
    %v590 = vadd.f32 %v501, %v589
    %v591 = vpop.f32.mrf.mxu0
    %v592 = vadd.f32 %v503, %v591
    %593 = vmatmul.bf16.gmra.mxu0 %v348
    %v594 = vpop.f32.mrf.mxu0
    %v595 = vadd.f32 %v506, %v594
    %v596 = vpop.f32.mrf.mxu0
    %v597 = vadd.f32 %v508, %v596
    %598 = vmatmul.bf16.gmra.mxu0 %v351
    %v599 = vpop.f32.mrf.mxu0
    %v600 = vadd.f32 %v511, %v599
    %v601 = vpop.f32.mrf.mxu0
    %v602 = vadd.f32 %v513, %v601
    %603 = vmatmul.bf16.gmra.mxu0 %v354
    %v604 = vpop.f32.mrf.mxu0
    %v605 = vadd.f32 %v516, %v604
    %v606 = vpop.f32.mrf.mxu0
    %v607 = vadd.f32 %v518, %v606
    %608 = vmatmul.bf16.gmra.mxu0 %v357
    %v609 = vpop.f32.mrf.mxu0
    %v610 = vadd.f32 %v521, %v609
    %v611 = vpop.f32.mrf.mxu0
    %v612 = vadd.f32 %v523, %v611
    %613 = vmatmul.bf16.gmra.mxu0 %v360
    %v614 = vpop.f32.mrf.mxu0
    %v615 = vadd.f32 %v526, %v614
    %v616 = vpop.f32.mrf.mxu0
    %v617 = vadd.f32 %v528, %v616
    %618 = vmatmul.bf16.gmra.mxu0 %v363
    %v619 = vpop.f32.mrf.mxu0
    %v620 = vadd.f32 %v531, %v619
    %v621 = vpop.f32.mrf.mxu0
    %v622 = vadd.f32 %v533, %v621
    %623 = vmatmul.bf16.gmra.mxu0 %v366
    %v624 = vpop.f32.mrf.mxu0
    %v625 = vadd.f32 %v536, %v624
    %v626 = vpop.f32.mrf.mxu0
    %v627 = vadd.f32 %v538, %v626
    %628 = vmatmul.bf16.gmra.mxu0 %v369
    %v629 = vpop.f32.mrf.mxu0
    %v630 = vadd.f32 %v541, %v629
    %v631 = vpop.f32.mrf.mxu0
    %v632 = vadd.f32 %v543, %v631
    %633 = vmatmul.bf16.gmra.mxu0 %v372
    %v634 = vpop.f32.mrf.mxu0
    %v635 = vadd.f32 %v546, %v634
    %v636 = vpop.f32.mrf.mxu0
    %v637 = vadd.f32 %v548, %v636
    %638 = vmatmul.bf16.gmra.mxu0 %v375
    %v639 = vpop.f32.mrf.mxu0
    %v640 = vadd.f32 %v551, %v639
    %v641 = vpop.f32.mrf.mxu0
    %v642 = vadd.f32 %v553, %v641
    %643 = vmatmul.bf16.gmra.mxu0 %v378
    %v644 = vpop.f32.mrf.mxu0
    %v645 = vadd.f32 %v556, %v644
    %v646 = vpop.f32.mrf.mxu0
    %v647 = vadd.f32 %v558, %v646
    %648 = vmatmul.bf16.gmra.mxu0 %v381
    %v649 = vpop.f32.mrf.mxu0
    %v650 = vadd.f32 %v561, %v649
    %v651 = vpop.f32.mrf.mxu0
    %v652 = vadd.f32 %v563, %v651
    %653 = vdwg.mxu0
    %v654 = vmax.f32 %v575, 0.0
    %v655 = vmax.f32 %v577, 0.0
    %v656 = vmax.f32 %v580, 0.0
    %v657 = vmax.f32 %v582, 0.0
    %v658 = vmax.f32 %v585, 0.0
    %v659 = vmax.f32 %v587, 0.0
    %v660 = vmax.f32 %v590, 0.0
    %v661 = vmax.f32 %v592, 0.0
    %v662 = vmax.f32 %v595, 0.0
    %v663 = vmax.f32 %v597, 0.0
    %v664 = vmax.f32 %v600, 0.0
    %v665 = vmax.f32 %v602, 0.0
    %v666 = vmax.f32 %v605, 0.0
    %v667 = vmax.f32 %v607, 0.0
    %v668 = vmax.f32 %v610, 0.0
    %v669 = vmax.f32 %v612, 0.0
    %v670 = vmax.f32 %v615, 0.0
    %v671 = vmax.f32 %v617, 0.0
    %v672 = vmax.f32 %v620, 0.0
    %v673 = vmax.f32 %v622, 0.0
    %v674 = vmax.f32 %v625, 0.0
    %v675 = vmax.f32 %v627, 0.0
    %v676 = vmax.f32 %v630, 0.0
    %v677 = vmax.f32 %v632, 0.0
    %v678 = vmax.f32 %v635, 0.0
    %v679 = vmax.f32 %v637, 0.0
    %v680 = vmax.f32 %v640, 0.0
    %v681 = vmax.f32 %v642, 0.0
    %v682 = vmax.f32 %v645, 0.0
    %v683 = vmax.f32 %v647, 0.0
    %v684 = vmax.f32 %v650, 0.0
    %v685 = vmax.f32 %v652, 0.0
    %v686 = vpack.c.bf16 %v655, %v654
    %v687 = vpack.c.bf16 %v657, %v656
    %v688 = vpack.c.bf16 %v659, %v658
    %v689 = vpack.c.bf16 %v661, %v660
    %v690 = vpack.c.bf16 %v663, %v662
    %v691 = vpack.c.bf16 %v665, %v664
    %v692 = vpack.c.bf16 %v667, %v666
    %v693 = vpack.c.bf16 %v669, %v668
    %v694 = vpack.c.bf16 %v671, %v670
    %v695 = vpack.c.bf16 %v673, %v672
    %v696 = vpack.c.bf16 %v675, %v674
    %v697 = vpack.c.bf16 %v677, %v676
    %v698 = vpack.c.bf16 %v679, %v678
    %v699 = vpack.c.bf16 %v681, %v680
    %v700 = vpack.c.bf16 %v683, %v682
    %v701 = vpack.c.bf16 %v685, %v684
    %v702 = vld [vmem:[%s3] sm:$0xf]
    %v703 = vld [vmem:[%s3 + $0x4] sm:$0xf]
    %v704 = vld [vmem:[%s3 + $0x8] sm:$0xf]
    %v705 = vld [vmem:[%s3 + $0xc] sm:$0xf]
    %v706 = vld [vmem:[%s3 + $0x10] sm:$0xf]
    %v707 = vld [vmem:[%s3 + $0x14] sm:$0xf]
    %v708 = vld [vmem:[%s3 + $0x18] sm:$0xf]
    %v709 = vld [vmem:[%s3 + $0x1c] sm:$0xf]
    %v710 = vld [vmem:[%s3 + $0x20] sm:$0xf]
    %v711 = vld [vmem:[%s3 + $0x24] sm:$0xf]
    %v712 = vld [vmem:[%s3 + $0x28] sm:$0xf]
    %v713 = vld [vmem:[%s3 + $0x2c] sm:$0xf]
    %v714 = vld [vmem:[%s3 + $0x30] sm:$0xf]
    %v715 = vld [vmem:[%s3 + $0x34] sm:$0xf]
    %v716 = vld [vmem:[%s3 + $0x38] sm:$0xf]
    %v717 = vld [vmem:[%s3 + $0x3c] sm:$0xf]
    %v718 = vld [vmem:[%s4] sm:$0x1]
    %v720 = vperm.slane %v718, 0
    %v738 = vunpack.c.l.b16 %v702
    %v739 = vunpack.c.l.b16 %v703
    %v740 = vunpack.c.l.b16 %v704
    %v741 = vunpack.c.l.b16 %v705
    %v742 = vunpack.c.l.b16 %v706
    %v743 = vunpack.c.l.b16 %v707
    %v744 = vunpack.c.l.b16 %v708
    %v745 = vunpack.c.l.b16 %v709
    %v746 = vunpack.c.l.b16 %v710
    %v747 = vunpack.c.l.b16 %v711
    %v748 = vunpack.c.l.b16 %v712
    %v749 = vunpack.c.l.b16 %v713
    %v750 = vunpack.c.l.b16 %v714
    %v751 = vunpack.c.l.b16 %v715
    %v752 = vunpack.c.l.b16 %v716
    %v753 = vunpack.c.l.b16 %v717
    %v754 = vpack.c.b16 %v739, %v738
    %v755 = vpack.c.b16 %v741, %v740
    %v756 = vpack.c.b16 %v743, %v742
    %v757 = vpack.c.b16 %v745, %v744
    %v758 = vpack.c.b16 %v747, %v746
    %v759 = vpack.c.b16 %v749, %v748
    %v760 = vpack.c.b16 %v751, %v750
    %v761 = vpack.c.b16 %v753, %v752
    %770 = vmatpush.bf16.msra.mxu0 %v761
    %771 = vmatpush.bf16.msra.mxu0 %v760
    %772 = vmatpush.bf16.msra.mxu0 %v759
    %773 = vmatpush.bf16.msra.mxu0 %v758
    %774 = vmatpush.bf16.msra.mxu0 %v757
    %775 = vmatpush.bf16.msra.mxu0 %v756
    %776 = vmatpush.bf16.msra.mxu0 %v755
    %777 = vmatpush.bf16.msra.mxu0 %v754
    %778 = vmatmul.bf16.gmra.mxu0 %v686
    %v779 = vpop.f32.mrf.mxu0
    %v780 = vadd.f32 %v720, %v779
    %v781 = vpop.f32.mrf.mxu0
    %v782 = vadd.f32 %v720, %v781
    %783 = vmatmul.bf16.gmra.mxu0 %v687
    %v784 = vpop.f32.mrf.mxu0
    %v785 = vadd.f32 %v720, %v784
    %v786 = vpop.f32.mrf.mxu0
    %v787 = vadd.f32 %v720, %v786
    %788 = vmatmul.bf16.gmra.mxu0 %v688
    %v789 = vpop.f32.mrf.mxu0
    %v790 = vadd.f32 %v720, %v789
    %v791 = vpop.f32.mrf.mxu0
    %v792 = vadd.f32 %v720, %v791
    %793 = vmatmul.bf16.gmra.mxu0 %v689
    %v794 = vpop.f32.mrf.mxu0
    %v795 = vadd.f32 %v720, %v794
    %v796 = vpop.f32.mrf.mxu0
    %v797 = vadd.f32 %v720, %v796
    %798 = vmatmul.bf16.gmra.mxu0 %v690
    %v799 = vpop.f32.mrf.mxu0
    %v800 = vadd.f32 %v720, %v799
    %v801 = vpop.f32.mrf.mxu0
    %v802 = vadd.f32 %v720, %v801
    %803 = vmatmul.bf16.gmra.mxu0 %v691
    %v804 = vpop.f32.mrf.mxu0
    %v805 = vadd.f32 %v720, %v804
    %v806 = vpop.f32.mrf.mxu0
    %v807 = vadd.f32 %v720, %v806
    %808 = vmatmul.bf16.gmra.mxu0 %v692
    %v809 = vpop.f32.mrf.mxu0
    %v810 = vadd.f32 %v720, %v809
    %v811 = vpop.f32.mrf.mxu0
    %v812 = vadd.f32 %v720, %v811
    %813 = vmatmul.bf16.gmra.mxu0 %v693
    %v814 = vpop.f32.mrf.mxu0
    %v815 = vadd.f32 %v720, %v814
    %v816 = vpop.f32.mrf.mxu0
    %v817 = vadd.f32 %v720, %v816
    %818 = vmatmul.bf16.gmra.mxu0 %v694
    %v819 = vpop.f32.mrf.mxu0
    %v820 = vadd.f32 %v720, %v819
    %v821 = vpop.f32.mrf.mxu0
    %v822 = vadd.f32 %v720, %v821
    %823 = vmatmul.bf16.gmra.mxu0 %v695
    %v824 = vpop.f32.mrf.mxu0
    %v825 = vadd.f32 %v720, %v824
    %v826 = vpop.f32.mrf.mxu0
    %v827 = vadd.f32 %v720, %v826
    %828 = vmatmul.bf16.gmra.mxu0 %v696
    %v829 = vpop.f32.mrf.mxu0
    %v830 = vadd.f32 %v720, %v829
    %v831 = vpop.f32.mrf.mxu0
    %v832 = vadd.f32 %v720, %v831
    %833 = vmatmul.bf16.gmra.mxu0 %v697
    %v834 = vpop.f32.mrf.mxu0
    %v835 = vadd.f32 %v720, %v834
    %v836 = vpop.f32.mrf.mxu0
    %v837 = vadd.f32 %v720, %v836
    %838 = vmatmul.bf16.gmra.mxu0 %v698
    %v839 = vpop.f32.mrf.mxu0
    %v840 = vadd.f32 %v720, %v839
    %v841 = vpop.f32.mrf.mxu0
    %v842 = vadd.f32 %v720, %v841
    %843 = vmatmul.bf16.gmra.mxu0 %v699
    %v844 = vpop.f32.mrf.mxu0
    %v845 = vadd.f32 %v720, %v844
    %v846 = vpop.f32.mrf.mxu0
    %v847 = vadd.f32 %v720, %v846
    %848 = vmatmul.bf16.gmra.mxu0 %v700
    %v849 = vpop.f32.mrf.mxu0
    %v850 = vadd.f32 %v720, %v849
    %v851 = vpop.f32.mrf.mxu0
    %v852 = vadd.f32 %v720, %v851
    %853 = vmatmul.bf16.gmra.mxu0 %v701
    %v854 = vpop.f32.mrf.mxu0
    %v855 = vadd.f32 %v720, %v854
    %v856 = vpop.f32.mrf.mxu0
    %v857 = vadd.f32 %v720, %v856
    %858 = vdwg.mxu0
    %v859 = vmax.f32 %v780, 0.0
    %v860 = vmax.f32 %v782, 0.0
    %v861 = vmax.f32 %v785, 0.0
    %v862 = vmax.f32 %v787, 0.0
    %v863 = vmax.f32 %v790, 0.0
    %v864 = vmax.f32 %v792, 0.0
    %v865 = vmax.f32 %v795, 0.0
    %v866 = vmax.f32 %v797, 0.0
    %v867 = vmax.f32 %v800, 0.0
    %v868 = vmax.f32 %v802, 0.0
    %v869 = vmax.f32 %v805, 0.0
    %v870 = vmax.f32 %v807, 0.0
    %v871 = vmax.f32 %v810, 0.0
    %v872 = vmax.f32 %v812, 0.0
    %v873 = vmax.f32 %v815, 0.0
    %v874 = vmax.f32 %v817, 0.0
    %v875 = vmax.f32 %v820, 0.0
    %v876 = vmax.f32 %v822, 0.0
    %v877 = vmax.f32 %v825, 0.0
    %v878 = vmax.f32 %v827, 0.0
    %v879 = vmax.f32 %v830, 0.0
    %v880 = vmax.f32 %v832, 0.0
    %v881 = vmax.f32 %v835, 0.0
    %v882 = vmax.f32 %v837, 0.0
    %v883 = vmax.f32 %v840, 0.0
    %v884 = vmax.f32 %v842, 0.0
    %v885 = vmax.f32 %v845, 0.0
    %v886 = vmax.f32 %v847, 0.0
    %v887 = vmax.f32 %v850, 0.0
    %v888 = vmax.f32 %v852, 0.0
    %v889 = vmax.f32 %v855, 0.0
    %v890 = vmax.f32 %v857, 0.0
    %v891 = vpack.c.bf16 %v860, %v859
    %v892 = vpack.c.bf16 %v862, %v861
    %v893 = vpack.c.bf16 %v864, %v863
    %v894 = vpack.c.bf16 %v866, %v865
    %v895 = vpack.c.bf16 %v868, %v867
    %v896 = vpack.c.bf16 %v870, %v869
    %v897 = vpack.c.bf16 %v872, %v871
    %v898 = vpack.c.bf16 %v874, %v873
    %v899 = vpack.c.bf16 %v876, %v875
    %v900 = vpack.c.bf16 %v878, %v877
    %v901 = vpack.c.bf16 %v880, %v879
    %v902 = vpack.c.bf16 %v882, %v881
    %v903 = vpack.c.bf16 %v884, %v883
    %v904 = vpack.c.bf16 %v886, %v885
    %v905 = vpack.c.bf16 %v888, %v887
    %v906 = vpack.c.bf16 %v890, %v889
    %v907 = vld [vmem:[%s5] sm:$0xf]
    %v908 = vld [vmem:[%s5 + $0x4] sm:$0xf]
    %v909 = vld [vmem:[%s5 + $0x8] sm:$0xf]
    %v910 = vld [vmem:[%s5 + $0xc] sm:$0xf]
    %v911 = vld [vmem:[%s5 + $0x10] sm:$0xf]
    %v912 = vld [vmem:[%s5 + $0x14] sm:$0xf]
    %v913 = vld [vmem:[%s5 + $0x18] sm:$0xf]
    %v914 = vld [vmem:[%s5 + $0x1c] sm:$0xf]
    %v915 = vld [vmem:[%s5 + $0x20] sm:$0xf]
    %v916 = vld [vmem:[%s5 + $0x24] sm:$0xf]
    %v917 = vld [vmem:[%s5 + $0x28] sm:$0xf]
    %v918 = vld [vmem:[%s5 + $0x2c] sm:$0xf]
    %v919 = vld [vmem:[%s5 + $0x30] sm:$0xf]
    %v920 = vld [vmem:[%s5 + $0x34] sm:$0xf]
    %v921 = vld [vmem:[%s5 + $0x38] sm:$0xf]
    %v922 = vld [vmem:[%s5 + $0x3c] sm:$0xf]
    %v923 = vld [vmem:[%s6] sm:$0x1]
    %v925 = vperm.slane %v923, 0
    %v943 = vunpack.c.l.b16 %v907
    %v944 = vunpack.c.l.b16 %v908
    %v945 = vunpack.c.l.b16 %v909
    %v946 = vunpack.c.l.b16 %v910
    %v947 = vunpack.c.l.b16 %v911
    %v948 = vunpack.c.l.b16 %v912
    %v949 = vunpack.c.l.b16 %v913
    %v950 = vunpack.c.l.b16 %v914
    %v951 = vunpack.c.l.b16 %v915
    %v952 = vunpack.c.l.b16 %v916
    %v953 = vunpack.c.l.b16 %v917
    %v954 = vunpack.c.l.b16 %v918
    %v955 = vunpack.c.l.b16 %v919
    %v956 = vunpack.c.l.b16 %v920
    %v957 = vunpack.c.l.b16 %v921
    %v958 = vunpack.c.l.b16 %v922
    %v959 = vpack.c.b16 %v944, %v943
    %v960 = vpack.c.b16 %v946, %v945
    %v961 = vpack.c.b16 %v948, %v947
    %v962 = vpack.c.b16 %v950, %v949
    %v963 = vpack.c.b16 %v952, %v951
    %v964 = vpack.c.b16 %v954, %v953
    %v965 = vpack.c.b16 %v956, %v955
    %v966 = vpack.c.b16 %v958, %v957
    %975 = vmatpush.bf16.msra.mxu0 %v966
    %976 = vmatpush.bf16.msra.mxu0 %v965
    %977 = vmatpush.bf16.msra.mxu0 %v964
    %978 = vmatpush.bf16.msra.mxu0 %v963
    %979 = vmatpush.bf16.msra.mxu0 %v962
    %980 = vmatpush.bf16.msra.mxu0 %v961
    %981 = vmatpush.bf16.msra.mxu0 %v960
    %982 = vmatpush.bf16.msra.mxu0 %v959
    %983 = vmatmul.bf16.gmra.mxu0 %v891
    %v984 = vpop.f32.mrf.mxu0
    %v985 = vadd.f32 %v925, %v984
    %v986 = vpop.f32.mrf.mxu0
    %v987 = vadd.f32 %v925, %v986
    %988 = vmatmul.bf16.gmra.mxu0 %v892
    %v989 = vpop.f32.mrf.mxu0
    %v990 = vadd.f32 %v925, %v989
    %v991 = vpop.f32.mrf.mxu0
    %v992 = vadd.f32 %v925, %v991
    %993 = vmatmul.bf16.gmra.mxu0 %v893
    %v994 = vpop.f32.mrf.mxu0
    %v995 = vadd.f32 %v925, %v994
    %v996 = vpop.f32.mrf.mxu0
    %v997 = vadd.f32 %v925, %v996
    %998 = vmatmul.bf16.gmra.mxu0 %v894
    %v999 = vpop.f32.mrf.mxu0
    %v1000 = vadd.f32 %v925, %v999
    %v1001 = vpop.f32.mrf.mxu0
    %v1002 = vadd.f32 %v925, %v1001
    %1003 = vmatmul.bf16.gmra.mxu0 %v895
    %v1004 = vpop.f32.mrf.mxu0
    %v1005 = vadd.f32 %v925, %v1004
    %v1006 = vpop.f32.mrf.mxu0
    %v1007 = vadd.f32 %v925, %v1006
    %1008 = vmatmul.bf16.gmra.mxu0 %v896
    %v1009 = vpop.f32.mrf.mxu0
    %v1010 = vadd.f32 %v925, %v1009
    %v1011 = vpop.f32.mrf.mxu0
    %v1012 = vadd.f32 %v925, %v1011
    %1013 = vmatmul.bf16.gmra.mxu0 %v897
    %v1014 = vpop.f32.mrf.mxu0
    %v1015 = vadd.f32 %v925, %v1014
    %v1016 = vpop.f32.mrf.mxu0
    %v1017 = vadd.f32 %v925, %v1016
    %1018 = vmatmul.bf16.gmra.mxu0 %v898
    %v1019 = vpop.f32.mrf.mxu0
    %v1020 = vadd.f32 %v925, %v1019
    %v1021 = vpop.f32.mrf.mxu0
    %v1022 = vadd.f32 %v925, %v1021
    %1023 = vmatmul.bf16.gmra.mxu0 %v899
    %v1024 = vpop.f32.mrf.mxu0
    %v1025 = vadd.f32 %v925, %v1024
    %v1026 = vpop.f32.mrf.mxu0
    %v1027 = vadd.f32 %v925, %v1026
    %1028 = vmatmul.bf16.gmra.mxu0 %v900
    %v1029 = vpop.f32.mrf.mxu0
    %v1030 = vadd.f32 %v925, %v1029
    %v1031 = vpop.f32.mrf.mxu0
    %v1032 = vadd.f32 %v925, %v1031
    %1033 = vmatmul.bf16.gmra.mxu0 %v901
    %v1034 = vpop.f32.mrf.mxu0
    %v1035 = vadd.f32 %v925, %v1034
    %v1036 = vpop.f32.mrf.mxu0
    %v1037 = vadd.f32 %v925, %v1036
    %1038 = vmatmul.bf16.gmra.mxu0 %v902
    %v1039 = vpop.f32.mrf.mxu0
    %v1040 = vadd.f32 %v925, %v1039
    %v1041 = vpop.f32.mrf.mxu0
    %v1042 = vadd.f32 %v925, %v1041
    %1043 = vmatmul.bf16.gmra.mxu0 %v903
    %v1044 = vpop.f32.mrf.mxu0
    %v1045 = vadd.f32 %v925, %v1044
    %v1046 = vpop.f32.mrf.mxu0
    %v1047 = vadd.f32 %v925, %v1046
    %1048 = vmatmul.bf16.gmra.mxu0 %v904
    %v1049 = vpop.f32.mrf.mxu0
    %v1050 = vadd.f32 %v925, %v1049
    %v1051 = vpop.f32.mrf.mxu0
    %v1052 = vadd.f32 %v925, %v1051
    %1053 = vmatmul.bf16.gmra.mxu0 %v905
    %v1054 = vpop.f32.mrf.mxu0
    %v1055 = vadd.f32 %v925, %v1054
    %v1056 = vpop.f32.mrf.mxu0
    %v1057 = vadd.f32 %v925, %v1056
    %1058 = vmatmul.bf16.gmra.mxu0 %v906
    %v1059 = vpop.f32.mrf.mxu0
    %v1060 = vadd.f32 %v925, %v1059
    %v1061 = vpop.f32.mrf.mxu0
    %v1062 = vadd.f32 %v925, %v1061
    %1063 = vdwg.mxu0
    %v1064 = vmax.f32 %v985, 0.0
    %v1065 = vmax.f32 %v987, 0.0
    %v1066 = vmax.f32 %v990, 0.0
    %v1067 = vmax.f32 %v992, 0.0
    %v1068 = vmax.f32 %v995, 0.0
    %v1069 = vmax.f32 %v997, 0.0
    %v1070 = vmax.f32 %v1000, 0.0
    %v1071 = vmax.f32 %v1002, 0.0
    %v1072 = vmax.f32 %v1005, 0.0
    %v1073 = vmax.f32 %v1007, 0.0
    %v1074 = vmax.f32 %v1010, 0.0
    %v1075 = vmax.f32 %v1012, 0.0
    %v1076 = vmax.f32 %v1015, 0.0
    %v1077 = vmax.f32 %v1017, 0.0
    %v1078 = vmax.f32 %v1020, 0.0
    %v1079 = vmax.f32 %v1022, 0.0
    %v1080 = vmax.f32 %v1025, 0.0
    %v1081 = vmax.f32 %v1027, 0.0
    %v1082 = vmax.f32 %v1030, 0.0
    %v1083 = vmax.f32 %v1032, 0.0
    %v1084 = vmax.f32 %v1035, 0.0
    %v1085 = vmax.f32 %v1037, 0.0
    %v1086 = vmax.f32 %v1040, 0.0
    %v1087 = vmax.f32 %v1042, 0.0
    %v1088 = vmax.f32 %v1045, 0.0
    %v1089 = vmax.f32 %v1047, 0.0
    %v1090 = vmax.f32 %v1050, 0.0
    %v1091 = vmax.f32 %v1052, 0.0
    %v1092 = vmax.f32 %v1055, 0.0
    %v1093 = vmax.f32 %v1057, 0.0
    %v1094 = vmax.f32 %v1060, 0.0
    %v1095 = vmax.f32 %v1062, 0.0
    %v1096 = vld [vmem:[%s7] sm:$0xf]
    %v1097 = vpack.c.bf16 %v1065, %v1064
    %v1098 = vpack.c.bf16 %v1067, %v1066
    %v1099 = vpack.c.bf16 %v1069, %v1068
    %v1100 = vpack.c.bf16 %v1071, %v1070
    %v1101 = vpack.c.bf16 %v1073, %v1072
    %v1102 = vpack.c.bf16 %v1075, %v1074
    %v1103 = vpack.c.bf16 %v1077, %v1076
    %v1104 = vpack.c.bf16 %v1079, %v1078
    %v1105 = vpack.c.bf16 %v1081, %v1080
    %v1106 = vpack.c.bf16 %v1083, %v1082
    %v1107 = vpack.c.bf16 %v1085, %v1084
    %v1108 = vpack.c.bf16 %v1087, %v1086
    %v1109 = vpack.c.bf16 %v1089, %v1088
    %v1110 = vpack.c.bf16 %v1091, %v1090
    %v1111 = vpack.c.bf16 %v1093, %v1092
    %v1112 = vpack.c.bf16 %v1095, %v1094
    %1113 = vmatpush.bf16.xpose.msra.mxu0 %v1104
    %1114 = vmatpush.bf16.xpose.msra.mxu0 %v1103
    %1115 = vmatpush.bf16.xpose.msra.mxu0 %v1102
    %1116 = vmatpush.bf16.xpose.msra.mxu0 %v1101
    %1117 = vmatpush.bf16.xpose.msra.mxu0 %v1100
    %1118 = vmatpush.bf16.xpose.msra.mxu0 %v1099
    %1119 = vmatpush.bf16.xpose.msra.mxu0 %v1098
    %1120 = vmatpush.bf16.xpose.msra.mxu0 %v1097
    %1121 = vmatmul.bf16.gmra.mxu0 %v1096
    %v1122 = vpop.f32.mrf.mxu0
    %v1123 = vadd.f32 0.0, %v1122
    %v1124 = vpop.f32.mrf.mxu0
    %1125 = vdwg.mxu0
    %1126 = vmatpush.bf16.xpose.msra.mxu0 %v1112
    %1127 = vmatpush.bf16.xpose.msra.mxu0 %v1111
    %1128 = vmatpush.bf16.xpose.msra.mxu0 %v1110
    %1129 = vmatpush.bf16.xpose.msra.mxu0 %v1109
    %1130 = vmatpush.bf16.xpose.msra.mxu0 %v1108
    %1131 = vmatpush.bf16.xpose.msra.mxu0 %v1107
    %1132 = vmatpush.bf16.xpose.msra.mxu0 %v1106
    %1133 = vmatpush.bf16.xpose.msra.mxu0 %v1105
    %1134 = vmatmul.bf16.gmra.mxu0 %v1096
    %v1135 = vpop.f32.mrf.mxu0
    %v1136 = vadd.f32 0.0, %v1135
    %v1137 = vpop.f32.mrf.mxu0
    %1138 = vdwg.mxu0
    %s1139 = sld [smem:[#allocation2]]
    %v1140 = vstv %s1139
    %v1141 = vadd.f32 %v1123, %v1140
    %v1142 = vadd.f32 %v1136, %v1140
    %v1143 = vmul.f32 %v1141, 0.5
    %v1144 = vmul.f32 %v1142, 0.5
    %v1145 = vtanh.pop %v1143
    %v1146 = vtanh.pop %v1144
    %v1147 = vadd.f32 %v1145, 1.0
    %v1148 = vadd.f32 %v1146, 1.0
    %v1149 = vmul.f32 %v1147, 0.5
    %v1150 = vmul.f32 %v1148, 0.5
    %v1153 = vrot.slane %v1150, 7
    %vm1154 = vcmask 1040384
    %v1155 = vsel %vm1154, %v1149, %v1153
    %v1157 = vlaneseq
    %vm1158 = vcmp.ge.s32.totalorder %v1157, 0
    %vm1159 = vcmp.lt.s32.totalorder %v1157, 256
    %vm1160 = vmand %vm1158, %vm1159
    %1161 = vst.msk [vmem:[#allocation3] sm:$0x3] %vm1160, %v1155
    // Predicated region
    $region38: #{finetuning_model_forward.1} parent=1 // pred_check
      _
    $region39: #{finetuning_model_forward.1} parent=1 // pred_check_branch
      %1163 = sbr.rel (0) target = $region41
    $region40: #{finetuning_model_forward.1} parent=1 // pred_region
      %1165 = vsyncadd [#allocation4], 0
      %s1167 = sshll.u32 [#allocation3], 4
      %s1168 = int_to_ptr.vmem [resolvable:$true] %s1167
      %s1169 = sshll.u32 %s9, 4
      %s1170 = int_to_ptr.hbm [resolvable:$true] %s1169
      %1172 = dma.vmem_to_hbm [thread:$0]  %s1168, 32, %s1170, [#allocation4]
    $region41: #{finetuning_model_forward.1} parent=1 // pred_fallthru
      _
    // Predicated region
    $region42: #{finetuning_model_forward.1} parent=1 // pred_check
      _
    $region43: #{finetuning_model_forward.1} parent=1 // pred_check_branch
      %1174 = sbr.rel (0) target = $region45
    $region44: #{finetuning_model_forward.1} parent=1 // pred_region
      %1176 = dma.done [#allocation4], 32
    $region45: #{finetuning_model_forward.1} parent=1 // pred_fallthru
      _
    %1177 = vsyncpa [#allocation4], 1

</llo_original>
